<compile_context>
chip_gen: v6e
topology: v6e:2x2x1
jax: 0.10.0
libtpu: 0.0.40
codegen_flags: <defaults>
</compile_context>

<pallas_src>
import functools

import jax
import jax.numpy as jnp
from jax.experimental import pallas as pl
from jax.experimental.pallas import tpu as pltpu


# Darknet/YOLO convention. TODO(synk): confirm against the reference module's
# nn.LeakyReLU negative_slope (torch default is 0.01).
LEAKY_SLOPE = 0.1


def _round_up(x, m):
    return ((x + m - 1) // m) * m


def _apply_act(x, act):
    if act == "relu":
        return jnp.maximum(x, 0.0)
    if act == "leaky":
        return jnp.where(x > 0.0, x, LEAKY_SLOPE * x)
    return x  # "none"


# ---------------------------------------------------------------------------
# Pallas kernel 1: fused (matmul + bias + activation), bf16 in / f32 acc
# ---------------------------------------------------------------------------
def _mm_bias_act_kernel(a_ref, w_ref, b_ref, o_ref, *, act):
    acc = jnp.dot(a_ref[...], w_ref[...], preferred_element_type=jnp.float32)
    acc = acc + b_ref[...]
    o_ref[...] = _apply_act(acc, act).astype(o_ref.dtype)


def matmul_bias_act(a, w, b, act="none"):
    """a: (M, K), w: (K, Cout), b: (Cout,) -> (M, Cout) f32.

    Cout is zero-padded to a multiple of 128 (lane-dense stores) and sliced
    back after the call; operands are cast to bf16, accumulation is f32.
    """
    M, K = a.shape
    Kw, cout = w.shape
    assert K == Kw
    coutp = _round_up(cout, 128)
    if coutp != cout:
        w = jnp.pad(w, ((0, 0), (0, coutp - cout)))
        b = jnp.pad(b, ((0, coutp - cout),))

    # Full-M tile, but split into 2 grid points when M is large enough so the
    # "parallel" grid axis can be sharded across 2 TensorCores (v7x).
    if M > 256:
        tm = _round_up(pl.cdiv(M, 2), 16)   # 16: bf16 sublane packing
    else:
        tm = _round_up(M, 8)
    mp = _round_up(M, tm)
    if mp != M:
        a = jnp.pad(a, ((0, mp - M), (0, 0)))

    a = a.astype(jnp.bfloat16)
    w = w.astype(jnp.bfloat16)
    b2 = b.reshape(1, coutp).astype(jnp.float32)

    out = pl.pallas_call(
        functools.partial(_mm_bias_act_kernel, act=act),
        out_shape=jax.ShapeDtypeStruct((mp, coutp), jnp.float32),
        grid_spec=pltpu.PrefetchScalarGridSpec(
            num_scalar_prefetch=0,
            grid=(mp // tm,),
            in_specs=[
                pl.BlockSpec((tm, K), lambda i: (i, 0)),       # activations
                pl.BlockSpec((K, coutp), lambda i: (0, 0)),    # full weight
                pl.BlockSpec((1, coutp), lambda i: (0, 0)),    # bias row
            ],
            out_specs=pl.BlockSpec((tm, coutp), lambda i: (i, 0)),
        ),
        compiler_params=pltpu.CompilerParams(
            dimension_semantics=("parallel",)),
    )(a, w, b2)
    return out[:M, :cout]


# ---------------------------------------------------------------------------
# Pallas kernel 2: direct 3x3 stride-1 conv (padding=1) — no HBM im2col.
# The kernel reads 9 statically shifted row-windows of the flattened padded
# feature map and accumulates 9 MXU matmuls into an f32 accumulator.
# ---------------------------------------------------------------------------
def _conv3x3_kernel(x_ref, w_ref, b_ref, o_ref, *, offsets, act):
    m, coutp = o_ref.shape
    acc = jnp.zeros((m, coutp), jnp.float32)
    for t, off in enumerate(offsets):               # static 9-tap loop
        a = x_ref[pl.ds(off, m), :].astype(jnp.bfloat16)
        acc = acc + jnp.dot(a, w_ref[t], preferred_element_type=jnp.float32)
    acc = acc + b_ref[...]
    o_ref[...] = _apply_act(acc, act).astype(o_ref.dtype)


def conv3x3_s1(x, w, b, act="none"):
    """3x3 / stride 1 / padding 1 conv. x: (N,H,W,Cin), w: (3,3,Cin,Cout)."""
    N, H, W, Cin = x.shape
    cout = w.shape[-1]
    coutp = _round_up(cout, 128)
    Hp, Wp = H + 2, W + 2
    xp = jnp.pad(x, ((0, 0), (1, 1), (1, 1), (0, 0)))
    m = N * Hp * Wp                          # outputs for ALL padded positions
    max_off = 2 * Wp + 2
    x_flat = jnp.pad(xp.reshape(m, Cin), ((0, max_off), (0, 0)))
    offsets = tuple(i * Wp + j for i in range(3) for j in range(3))

    w9 = w.reshape(9, Cin, cout)
    if coutp != cout:
        w9 = jnp.pad(w9, ((0, 0), (0, 0), (0, coutp - cout)))
        b = jnp.pad(b, ((0, coutp - cout),))
    w9 = w9.astype(jnp.bfloat16)
    b2 = b.reshape(1, coutp).astype(jnp.float32)

    out = pl.pallas_call(
        functools.partial(_conv3x3_kernel, offsets=offsets, act=act),
        out_shape=jax.ShapeDtypeStruct((m, coutp), jnp.float32),
        in_specs=[
            pl.BlockSpec(memory_space=pltpu.MemorySpace.VMEM),
            pl.BlockSpec(memory_space=pltpu.MemorySpace.VMEM),
            pl.BlockSpec(memory_space=pltpu.MemorySpace.VMEM),
        ],
        out_specs=pl.BlockSpec(memory_space=pltpu.MemorySpace.VMEM),
    )(x_flat, w9, b2)
    # valid region: rows with hp < H and wp < W; border/garbage rows discarded
    return out.reshape(N, Hp, Wp, coutp)[:, :H, :W, :cout]


# ---------------------------------------------------------------------------
# Other conv flavours built on the matmul kernel
# ---------------------------------------------------------------------------
def conv1x1(x, w, b, act="none"):
    """1x1 conv: im2col is just a reshape (no blowup)."""
    N, H, W, Cin = x.shape
    cout = w.shape[-1]
    out = matmul_bias_act(x.reshape(N * H * W, Cin),
                          w.reshape(Cin, cout), b, act=act)
    return out.reshape(N, H, W, cout)


def conv3x3_s2(x, w, b, act="none"):
    """3x3 / stride 2 / padding 1 conv via im2col matmul.

    Stride-2 overlap is only ~2.25x and the backbone maps are the smallest
    tensors in the net, so im2col is acceptable here (bf16 halves its bytes).
    """
    N, H, W, Cin = x.shape
    cout = w.shape[-1]
    xp = jnp.pad(x, ((0, 0), (1, 1), (1, 1), (0, 0)))
    Ho = (H + 2 - 3) // 2 + 1
    Wo = (W + 2 - 3) // 2 + 1
    patches = []
    for i in range(3):
        for j in range(3):
            patches.append(xp[:, i:i + 2 * Ho:2, j:j + 2 * Wo:2, :])
    a = jnp.concatenate(patches, axis=-1).reshape(N * Ho * Wo, 9 * Cin)
    out = matmul_bias_act(a, w.reshape(9 * Cin, cout), b, act=act)
    return out.reshape(N, Ho, Wo, cout)


def upsample2x(x):
    # nearest-neighbor 2x upsample (FPN top-down path) -- XLA glue
    return jnp.repeat(jnp.repeat(x, 2, axis=1), 2, axis=2)


# ---------------------------------------------------------------------------
# Deterministic parameter construction
# ---------------------------------------------------------------------------
def _conv_params(key, kh, kw, cin, cout):
    kw_, kb_ = jax.random.split(key)
    scale = 1.0 / jnp.sqrt(jnp.float32(kh * kw * cin))
    w = jax.random.normal(kw_, (kh, kw, cin, cout), jnp.float32) * scale
    b = jax.random.normal(kb_, (cout,), jnp.float32) * 0.01
    return w, b


def init_yolo_params(key, *, fpn_channels=32, num_classes=4, num_anchors=3):
    p = {}
    cnt = [0]

    def nk():
        cnt[0] += 1
        return jax.random.fold_in(key, cnt[0])

    # backbone: stem + 3 downsampling stages (pyramid levels 3, 4, 5)
    p["stem"] = _conv_params(nk(), 3, 3, 3, 8)
    p["stage1"] = _conv_params(nk(), 3, 3, 8, 16)    # -> C3
    p["stage2"] = _conv_params(nk(), 3, 3, 16, 32)   # -> C4
    p["stage3"] = _conv_params(nk(), 3, 3, 32, 64)   # -> C5
    # neck (FPN): 1x1 laterals + 3x3 smoothing, all -> fpn_channels
    for lvl, cin in (("3", 16), ("4", 32), ("5", 64)):
        p["lat" + lvl] = _conv_params(nk(), 1, 1, cin, fpn_channels)
        p["smooth" + lvl] = _conv_params(nk(), 3, 3, fpn_channels, fpn_channels)
    # head (shared across levels)
    p["head_conv"] = _conv_params(nk(), 3, 3, fpn_channels, fpn_channels)
    p["head_box"] = _conv_params(nk(), 1, 1, fpn_channels, 4 * num_anchors)
    p["head_cls"] = _conv_params(nk(), 1, 1, fpn_channels, num_classes * num_anchors)
    return p


# ---------------------------------------------------------------------------
# Forward pass (mirrors YOLO.forward: stack -> backbone -> neck -> head)
# ---------------------------------------------------------------------------
def yolo_forward(images, params, *, num_classes=4, num_anchors=3):
    # torch.stack(x) on a tuple of CHW images, then NCHW -> NHWC
    x = jnp.stack(images)                       # (N, 3, H, W)
    x = jnp.transpose(x, (0, 2, 3, 1))          # (N, H, W, 3)

    # --- backbone ---
    x = conv3x3_s2(x, *params["stem"], act="leaky")
    c3 = conv3x3_s2(x, *params["stage1"], act="leaky")
    c4 = conv3x3_s2(c3, *params["stage2"], act="leaky")
    c5 = conv3x3_s2(c4, *params["stage3"], act="leaky")

    # --- neck: FPN top-down ---
    p5 = conv1x1(c5, *params["lat5"])
    p4 = conv1x1(c4, *params["lat4"]) + upsample2x(p5)
    p3 = conv1x1(c3, *params["lat3"]) + upsample2x(p4)
    p3 = conv3x3_s1(p3, *params["smooth3"], act="relu")
    p4 = conv3x3_s1(p4, *params["smooth4"], act="relu")
    p5 = conv3x3_s1(p5, *params["smooth5"], act="relu")

    # TODO(synk): anchor_generator caching (self.anchor) and bbox_decoder/NMS
    # are stateful / data-dependent post-processing not part of the returned
    # forward tensors; omitted here.

    # --- head ---
    # Shared 3x3 head conv per level, then ONE fused (box || cls) 1x1 matmul
    # over the concatenation of all pyramid levels (weights are shared).
    wb, bb = params["head_box"]
    wc, bc = params["head_cls"]
    cin = wb.shape[2]
    w_bc = jnp.concatenate([wb, wc], axis=-1).reshape(cin, -1)   # (C, 4A+CA)
    b_bc = jnp.concatenate([bb, bc], axis=0)
    nbox = 4 * num_anchors

    feats, shapes = [], []
    for feat in (p3, p4, p5):
        h = conv3x3_s1(feat, *params["head_conv"], act="relu")
        N, H, W, C = h.shape
        feats.append(h.reshape(N * H * W, C))
        shapes.append((N, H, W))
    pred = matmul_bias_act(jnp.concatenate(feats, axis=0), w_bc, b_bc,
                           act="none")                            # (sumM, 4A+CA)

    boxes_all, labels_all = [], []
    row = 0
    for (N, H, W) in shapes:
        m = N * H * W
        lvl = pred[row:row + m].reshape(N, H * W, nbox + num_classes * num_anchors)
        row += m
        boxes_all.append(lvl[..., :nbox].reshape(N, H * W * num_anchors, 4))
        labels_all.append(
            lvl[..., nbox:].reshape(N, H * W * num_anchors, num_classes))

    return {
        "boxes": jnp.concatenate(boxes_all, axis=1),
        "labels": jnp.concatenate(labels_all, axis=1),
    }


if __name__ == "__main__":
    key = jax.random.PRNGKey(0)
    num_classes, num_anchors = 4, 3
    params = init_yolo_params(key, fpn_channels=32,
                              num_classes=num_classes, num_anchors=num_anchors)

    # tuple of 2 images, each (3, 32, 32) -- matches torch.stack(x) semantics
    k1, k2 = jax.random.split(jax.random.fold_in(key, 1000))
    images = (
        jax.random.normal(k1, (3, 32, 32), jnp.float32),
        jax.random.normal(k2, (3, 32, 32), jnp.float32),
    )

    out = yolo_forward(images, params,
                       num_classes=num_classes, num_anchors=num_anchors)
    jax.block_until_ready(out)

    n_locs = (8 * 8 + 4 * 4 + 2 * 2) * num_anchors  # 252
    assert out["boxes"].shape == (2, n_locs, 4), out["boxes"].shape
    assert out["labels"].shape == (2, n_locs, num_classes), out["labels"].shape
    assert jnp.all(jnp.isfinite(out["boxes"])) and jnp.all(jnp.isfinite(out["labels"]))
    print("KERNEL_OK")
</pallas_src>

<mosaic_0001>
module attributes {stable_mosaic.version = 11 : i64} {
  func.func @_mm_bias_act_kernel(%arg0: i32, %arg1: memref<256x27xbf16, #tpu.memory_space<vmem>>, %arg2: memref<27x128xbf16, #tpu.memory_space<vmem>>, %arg3: memref<1x128xf32, #tpu.memory_space<vmem>>, %arg4: memref<256x128xf32, #tpu.memory_space<vmem>>) attributes {dimension_semantics = [#tpu.dimension_semantics<parallel>], iteration_bounds = array<i64: 2>, scalar_prefetch = 0 : i64, scratch_operands = 0 : i64, tpu.core_type = #tpu.core_type<tc>, window_params = [{transform_indices = @transform_0, window_bounds = array<i64: 256, 27>}, {pipeline_mode = #tpu.pipeline_mode<synchronous>, transform_indices = @transform_1, window_bounds = array<i64: 27, 128>}, {pipeline_mode = #tpu.pipeline_mode<synchronous>, transform_indices = @transform_2, window_bounds = array<i64: 1, 128>}, {transform_indices = @transform_3, window_bounds = array<i64: 256, 128>}]} {
    %c0 = arith.constant 0 : index
    %c0_0 = arith.constant 0 : index
    %0 = vector.load %arg1[%c0, %c0_0] : memref<256x27xbf16, #tpu.memory_space<vmem>>, vector<256x27xbf16>
    %c0_1 = arith.constant 0 : index
    %c0_2 = arith.constant 0 : index
    %1 = vector.load %arg2[%c0_1, %c0_2] : memref<27x128xbf16, #tpu.memory_space<vmem>>, vector<27x128xbf16>
    %cst = arith.constant dense<0.000000e+00> : vector<256x128xf32>
    %2 = tpu.matmul %0, %1, %cst {dimension_numbers = #tpu.dot_dimension_numbers<[1], [0], [0], [1], [0, 0, 1, 1], [], []>} : vector<256x27xbf16>, vector<27x128xbf16>, vector<256x128xf32> -> vector<256x128xf32>
    %c0_3 = arith.constant 0 : index
    %c0_4 = arith.constant 0 : index
    %3 = vector.load %arg3[%c0_3, %c0_4] : memref<1x128xf32, #tpu.memory_space<vmem>>, vector<1x128xf32>
    %4 = vector.broadcast %3 : vector<1x128xf32> to vector<256x128xf32>
    %5 = arith.addf %2, %4 : vector<256x128xf32>
    %cst_5 = arith.constant 0.000000e+00 : f32
    %6 = vector.broadcast %cst_5 : f32 to vector<256x128xf32>
    %7 = arith.cmpf ogt, %5, %6 : vector<256x128xf32>
    %cst_6 = arith.constant 1.000000e-01 : f32
    %8 = vector.broadcast %cst_6 : f32 to vector<256x128xf32>
    %9 = arith.mulf %8, %5 : vector<256x128xf32>
    %10 = arith.select %7, %5, %9 : vector<256x128xi1>, vector<256x128xf32>
    %c0_7 = arith.constant 0 : index
    %c0_8 = arith.constant 0 : index
    %11 = vector.load %arg4[%c0_7, %c0_8] : memref<256x128xf32, #tpu.memory_space<vmem>>, vector<256x128xf32>
    tpu.vector_store %arg4[%c0_7, %c0_8], %10 {strides = array<i32>} : memref<256x128xf32, #tpu.memory_space<vmem>>, vector<256x128xf32>,
    return
  }
  func.func @transform_0(%arg0: i32) -> (i32, i32) {
    %c0_i32 = arith.constant 0 : i32
    %c0_i32_0 = arith.constant 0 : i32
    return %arg0, %c0_i32 : i32, i32
  }
  func.func @transform_1(%arg0: i32) -> (i32, i32) {
    %c0_i32 = arith.constant 0 : i32
    %c0_i32_0 = arith.constant 0 : i32
    %c0_i32_1 = arith.constant 0 : i32
    return %c0_i32, %c0_i32_0 : i32, i32
  }
  func.func @transform_2(%arg0: i32) -> (i32, i32) {
    %c0_i32 = arith.constant 0 : i32
    %c0_i32_0 = arith.constant 0 : i32
    %c0_i32_1 = arith.constant 0 : i32
    return %c0_i32, %c0_i32_0 : i32, i32
  }
  func.func @transform_3(%arg0: i32) -> (i32, i32) {
    %c0_i32 = arith.constant 0 : i32
    %c0_i32_0 = arith.constant 0 : i32
    return %arg0, %c0_i32 : i32, i32
  }
}

</mosaic_0001>

<llo_original>
// kernel: tpu_custom_call.1
$region0: #{tpu_custom_call.1}
  #allocation0 [shape = 'u32[]', space=smem, size = 0x4, offset = 0x4, fixed_abs, tag = 'smem constant byte address 0x4 - core index']
  #allocation1 [shape = 'u32[144,128]{1,0:T(1,128)}', space=vmem, size = 0x12000, scoped, tag = 'internal scratch']
  %s0 = inlined_call_operand.vmem [shape: bf16[512,27], index: 0, kind: input, shape index: {}]
  %s1 = inlined_call_operand.vmem [shape: bf16[27,128], index: 1, kind: input, shape index: {}]
  %s2 = inlined_call_operand.vmem [shape: f32[1,128], index: 2, kind: input, shape index: {}]
  %s3 = inlined_call_operand.hbm [shape: f32[512,128], index: 3, kind: output, shape index: {}]
  %s4 = sld [smem:[#allocation0]]
  $region45: #{tpu_custom_call.1} parent=0
    _
  %s6 = ssub.s32 1, %s4
  %s7 = scalar_select 0, %s6, %s4
  $region1: #{tpu_custom_call.1} parent=0
    #allocation2 [shape = 'u8[262144]{0}', space=vmem, size = 0x40000, scoped, tag = 'output window, operand 0']
    #allocation3 [shape = 's32[2]{0}', space=sflag, size = 0x8, scoped, tag = 'scoped memory for tpu_custom_call.1']
    %8 = vsyncpa [#allocation3], 0
    %s9 = scalar_lea.sflag [#allocation3], 1
    %10 = vsyncpa %s9, 0
    loop: start=0, step=1, limit=4
    $region2: #{tpu_custom_call.1} parent=1 // loop_pre_header
      _
    $region3: #{tpu_custom_call.1} parent=1 // loop_header
      %s12 = sphi 0, %s16
      %p13 = scmp.ge.s32.totalorder %s12, 4
      %s22 = sphi 0, %s24
      %s25 = sphi 0, %s22
      %s26 = sphi 0, %s25
      %s42 = sphi 0, %s26
      %s46 = sphi 0, %s46
      %s48 = sphi 0, %s46
      %s49 = sphi 0, %s48
      %s63 = sphi 0, %s49
      %s67 = sphi 0, %s67
      %s69 = sphi 0, %s67
      %s70 = sphi 0, %s69
      %s84 = sphi 0, %s70
      %s90 = sphi 0, %s92
      %s93 = sphi 0, %s90
      %s94 = sphi 0, %s93
      %s110 = sphi 0, %s94
    $region4: #{tpu_custom_call.1} parent=1 // loop_header_branch
      %15 = sbr.rel (%p13) target = $region8
    $region5: #{tpu_custom_call.1} parent=1 // loop_body
      %s17 = ssub.s32 %s12, 1
      %s18 = ssub.s32 %s12, 2
      %s19 = sadd.s32 %s12, 1
      %s20 = ssub.s32 %s12, %s19
      %p21 = scmp.eq.s32.totalorder %s20, 0
      %s23 = sadd.s32 %s22, 1
      %s24 = scalar_select %p21, %s22, %s23
      %p27 = pneg %p21
      %p28 = scmp.eq.s32.totalorder %s12, 1
      %p29 = por %p27, %p28
      %p30 = scmp.ne.s32.totalorder %s22, %s25
      %p31 = scmp.eq.s32.totalorder %s12, 0
      %p32 = por %p30, %p31
      %p33 = scmp.ne.s32.totalorder %s22, %s25
      %p34 = scmp.eq.s32.totalorder %s17, 1
      %p35 = por %p33, %p34
      %p36 = scmp.ne.s32.totalorder %s25, %s26
      %p37 = scmp.eq.s32.totalorder %s17, 0
      %p38 = por %p36, %p37
      %p39 = scmp.ne.s32.totalorder %s25, %s26
      %p40 = scmp.eq.s32.totalorder %s18, 1
      %p41 = por %p39, %p40
      %p43 = scmp.ne.s32.totalorder %s26, %s42
      %p44 = scmp.eq.s32.totalorder %s18, 0
      %p45 = por %p43, %p44
      %s47 = sadd.s32 %s46, 1
      %p50 = scmp.eq.s32.totalorder %s12, 1
      %p51 = scmp.ne.s32.totalorder %s46, %s48
      %p52 = scmp.eq.s32.totalorder %s12, 0
      %p53 = por %p51, %p52
      %p54 = scmp.ne.s32.totalorder %s46, %s48
      %p55 = scmp.eq.s32.totalorder %s17, 1
      %p56 = por %p54, %p55
      %p57 = scmp.ne.s32.totalorder %s48, %s49
      %p58 = scmp.eq.s32.totalorder %s17, 0
      %p59 = por %p57, %p58
      %p60 = scmp.ne.s32.totalorder %s48, %s49
      %p61 = scmp.eq.s32.totalorder %s18, 1
      %p62 = por %p60, %p61
      %p64 = scmp.ne.s32.totalorder %s49, %s63
      %p65 = scmp.eq.s32.totalorder %s18, 0
      %p66 = por %p64, %p65
      %s68 = sadd.s32 %s67, 1
      %p71 = scmp.eq.s32.totalorder %s12, 1
      %p72 = scmp.ne.s32.totalorder %s67, %s69
      %p73 = scmp.eq.s32.totalorder %s12, 0
      %p74 = por %p72, %p73
      %p75 = scmp.ne.s32.totalorder %s67, %s69
      %p76 = scmp.eq.s32.totalorder %s17, 1
      %p77 = por %p75, %p76
      %p78 = scmp.ne.s32.totalorder %s69, %s70
      %p79 = scmp.eq.s32.totalorder %s17, 0
      %p80 = por %p78, %p79
      %p81 = scmp.ne.s32.totalorder %s69, %s70
      %p82 = scmp.eq.s32.totalorder %s18, 1
      %p83 = por %p81, %p82
      %p85 = scmp.ne.s32.totalorder %s70, %s84
      %p86 = scmp.eq.s32.totalorder %s18, 0
      %p87 = por %p85, %p86
      %s88 = ssub.s32 %s12, %s19
      %p89 = scmp.eq.s32.totalorder %s88, 0
      %s91 = sadd.s32 %s90, 1
      %s92 = scalar_select %p89, %s90, %s91
      %p95 = pneg %p89
      %p96 = scmp.eq.s32.totalorder %s12, 1
      %p97 = por %p95, %p96
      %p98 = scmp.ne.s32.totalorder %s90, %s93
      %p99 = scmp.eq.s32.totalorder %s12, 0
      %p100 = por %p98, %p99
      %p101 = scmp.ne.s32.totalorder %s90, %s93
      %p102 = scmp.eq.s32.totalorder %s17, 1
      %p103 = por %p101, %p102
      %p104 = scmp.ne.s32.totalorder %s93, %s94
      %p105 = scmp.eq.s32.totalorder %s17, 0
      %p106 = por %p104, %p105
      %p107 = scmp.ne.s32.totalorder %s93, %s94
      %p108 = scmp.eq.s32.totalorder %s18, 1
      %p109 = por %p107, %p108
      %p111 = scmp.ne.s32.totalorder %s94, %s110
      %p112 = scmp.eq.s32.totalorder %s18, 0
      %p113 = por %p111, %p112
      %p114 = scmp.le.s32.totalorder 1, %s12
      %p115 = scmp.lt.s32.totalorder %s12, 3
      %p116 = pnand %p114, %p115
      %p117 = pneg %p116
      // Predicated region
      $region9: #{tpu_custom_call.1} parent=5 // pred_check
        _
      $region10: #{tpu_custom_call.1} parent=5 // pred_check_branch
        %119 = sbr.rel (%p116) target = $region12
      $region11: #{tpu_custom_call.1} parent=5 // pred_region
        %s120 = ssub.s32 %s12, 1
        // Predicated region
        $region13: #{tpu_custom_call.1} parent=11 // pred_check
          %p121 = pneg %p59
        $region14: #{tpu_custom_call.1} parent=11 // pred_check_branch
          %123 = sbr.rel (%p121) target = $region16
        $region15: #{tpu_custom_call.1} parent=11 // pred_region
          _
        $region16: #{tpu_custom_call.1} parent=11 // pred_fallthru
          _
        // Predicated region
        $region17: #{tpu_custom_call.1} parent=11 // pred_check
          %p124 = pneg %p80
        $region18: #{tpu_custom_call.1} parent=11 // pred_check_branch
          %126 = sbr.rel (%p124) target = $region20
        $region19: #{tpu_custom_call.1} parent=11 // pred_region
          _
        $region20: #{tpu_custom_call.1} parent=11 // pred_fallthru
          _
      $region12: #{tpu_custom_call.1} parent=5 // pred_fallthru
        _
      %p127 = scmp.lt.s32.totalorder %s12, 2
      // Predicated region
      $region21: #{tpu_custom_call.1} parent=5 // pred_check
        %p128 = pneg %p127
      $region22: #{tpu_custom_call.1} parent=5 // pred_check_branch
        %130 = sbr.rel (%p128) target = $region24
      $region23: #{tpu_custom_call.1} parent=5 // pred_region
        // Predicated region
        $region25: #{tpu_custom_call.1} parent=23 // pred_check
          %p131 = pneg %p32
        $region26: #{tpu_custom_call.1} parent=23 // pred_check_branch
          %133 = sbr.rel (%p131) target = $region28
        $region27: #{tpu_custom_call.1} parent=23 // pred_region
          %s134 = smul.u32 32, %s12
          %p135 = scmp.lt.s32.totalorder %s134, 63
          %s136 = scalar_select %p135, %s134, 63
          %s137 = smul.addr %s136, 4
          %s138 = scalar_lea.vmem %s0, %s137
          %s139 = smul.u32 32, %s12
        $region28: #{tpu_custom_call.1} parent=23 // pred_fallthru
          _
      $region24: #{tpu_custom_call.1} parent=5 // pred_fallthru
        _
      %p140 = scmp.le.s32.totalorder 1, %s12
      %p141 = scmp.lt.s32.totalorder %s12, 3
      %p142 = pnand %p140, %p141
      %p143 = pneg %p142
      // Predicated region
      $region29: #{tpu_custom_call.1} parent=5 // pred_check
        _
      $region30: #{tpu_custom_call.1} parent=5 // pred_check_branch
        %145 = sbr.rel (%p142) target = $region32
      $region31: #{tpu_custom_call.1} parent=5 // pred_region
        %s146 = ssub.s32 %s12, 1
        %s147 = smul.u32 32, %s17
        %p148 = scmp.lt.s32.totalorder %s147, 63
        %s149 = scalar_select %p148, %s147, 63
        %s150 = smul.addr %s149, 4
        %s151 = scalar_lea.vmem %s0, %s150
        %p152 = pneg %p38
        %p153 = pneg %p35
        %p154 = pneg %p59
        %p155 = pneg %p56
        %p156 = pneg %p80
        %p157 = pneg %p77
        %p158 = pneg %p106
        %p159 = pneg %p103
        %s160 = sand.u32 %s93, 1
        %s161 = scalar_lea.sflag [#allocation3], %s160
        %s162 = sand.u32 %s93, 1
        %s163 = smul.addr %s162, 256
        %s164 = scalar_lea.vmem [#allocation2], %s163
        %s165 = smul.u32 32, %s17
        %p166 = scmp.lt.s32.totalorder %s165, 63
        %s167 = scalar_select %p166, %s165, 63
        %s168 = smul.addr %s167, 4
        %s169 = scalar_lea.vmem %s0, %s168
        %s170 = smul.u32 32, %s17
        %s171 = smul.u32 32, %s17
        %v173 = vld [vmem:[%s169] sm:$0xf]
        %v174 = vld [vmem:[%s169 + $0x4] sm:$0xf]
        %v175 = vld [vmem:[%s169 + $0x8] sm:$0xf]
        %v176 = vld [vmem:[%s169 + $0xc] sm:$0xf]
        %v177 = vld [vmem:[%s169 + $0x10] sm:$0xf]
        %v178 = vld [vmem:[%s169 + $0x14] sm:$0xf]
        %v179 = vld [vmem:[%s169 + $0x18] sm:$0xf]
        %v180 = vld [vmem:[%s169 + $0x1c] sm:$0xf]
        %v181 = vld [vmem:[%s169 + $0x20] sm:$0xf]
        %v182 = vld [vmem:[%s169 + $0x24] sm:$0xf]
        %v183 = vld [vmem:[%s169 + $0x28] sm:$0xf]
        %v184 = vld [vmem:[%s169 + $0x2c] sm:$0xf]
        %v185 = vld [vmem:[%s169 + $0x30] sm:$0xf]
        %v186 = vld [vmem:[%s169 + $0x34] sm:$0xf]
        %v187 = vld [vmem:[%s169 + $0x38] sm:$0xf]
        %v188 = vld [vmem:[%s169 + $0x3c] sm:$0xf]
        %v189 = vld [vmem:[%s169 + $0x40] sm:$0xf]
        %v190 = vld [vmem:[%s169 + $0x44] sm:$0xf]
        %v191 = vld [vmem:[%s169 + $0x48] sm:$0xf]
        %v192 = vld [vmem:[%s169 + $0x4c] sm:$0xf]
        %v193 = vld [vmem:[%s169 + $0x50] sm:$0xf]
        %v194 = vld [vmem:[%s169 + $0x54] sm:$0xf]
        %v195 = vld [vmem:[%s169 + $0x58] sm:$0xf]
        %v196 = vld [vmem:[%s169 + $0x5c] sm:$0xf]
        %v197 = vld [vmem:[%s169 + $0x60] sm:$0xf]
        %v198 = vld [vmem:[%s169 + $0x64] sm:$0xf]
        %v199 = vld [vmem:[%s169 + $0x68] sm:$0xf]
        %v200 = vld [vmem:[%s169 + $0x6c] sm:$0xf]
        %v201 = vld [vmem:[%s169 + $0x70] sm:$0xf]
        %v202 = vld [vmem:[%s169 + $0x74] sm:$0xf]
        %v203 = vld [vmem:[%s169 + $0x78] sm:$0xf]
        %v204 = vld [vmem:[%s169 + $0x7c] sm:$0xf]
        %v205 = vld [vmem:[%s1] sm:$0xf]
        %v206 = vld [vmem:[%s1 + $0x4] sm:$0xf]
        %v207 = vld [vmem:[%s1 + $0x8] sm:$0xf]
        %v208 = vld [vmem:[%s1 + $0xc] sm:$0x3]
        %v209 = vld [vmem:[%s2] sm:$0x1]
        %v211 = vlaneseq
        %v212 = vshrl.u32 %v211, 7
        %v213 = vsub.s32 0, %v212
        %v214 = vrot.slane %v209, %v213
        %v248 = vunpack.c.l.b16 %v173
        %v249 = vunpack.c.l.b16 %v174
        %v250 = vunpack.c.l.b16 %v175
        %v251 = vunpack.c.l.b16 %v176
        %v252 = vunpack.c.l.b16 %v177
        %v253 = vunpack.c.l.b16 %v178
        %v254 = vunpack.c.l.b16 %v179
        %v255 = vunpack.c.l.b16 %v180
        %v256 = vunpack.c.l.b16 %v181
        %v257 = vunpack.c.l.b16 %v182
        %v258 = vunpack.c.l.b16 %v183
        %v259 = vunpack.c.l.b16 %v184
        %v260 = vunpack.c.l.b16 %v185
        %v261 = vunpack.c.l.b16 %v186
        %v262 = vunpack.c.l.b16 %v187
        %v263 = vunpack.c.l.b16 %v188
        %v264 = vunpack.c.l.b16 %v189
        %v265 = vunpack.c.l.b16 %v190
        %v266 = vunpack.c.l.b16 %v191
        %v267 = vunpack.c.l.b16 %v192
        %v268 = vunpack.c.l.b16 %v193
        %v269 = vunpack.c.l.b16 %v194
        %v270 = vunpack.c.l.b16 %v195
        %v271 = vunpack.c.l.b16 %v196
        %v272 = vunpack.c.l.b16 %v197
        %v273 = vunpack.c.l.b16 %v198
        %v274 = vunpack.c.l.b16 %v199
        %v275 = vunpack.c.l.b16 %v200
        %v276 = vunpack.c.l.b16 %v201
        %v277 = vunpack.c.l.b16 %v202
        %v278 = vunpack.c.l.b16 %v203
        %v279 = vunpack.c.l.b16 %v204
        %v280 = vpack.c.b16 %v249, %v248
        %v281 = vpack.c.b16 %v251, %v250
        %v282 = vpack.c.b16 %v253, %v252
        %v283 = vpack.c.b16 %v255, %v254
        %v284 = vpack.c.b16 %v257, %v256
        %v285 = vpack.c.b16 %v259, %v258
        %v286 = vpack.c.b16 %v261, %v260
        %v287 = vpack.c.b16 %v263, %v262
        %v288 = vpack.c.b16 %v265, %v264
        %v289 = vpack.c.b16 %v267, %v266
        %v290 = vpack.c.b16 %v269, %v268
        %v291 = vpack.c.b16 %v271, %v270
        %v292 = vpack.c.b16 %v273, %v272
        %v293 = vpack.c.b16 %v275, %v274
        %v294 = vpack.c.b16 %v277, %v276
        %v295 = vpack.c.b16 %v279, %v278
        %v300 = vunpack.c.l.b16 %v205
        %v301 = vunpack.c.l.b16 %v206
        %v302 = vunpack.c.l.b16 %v207
        %v303 = vunpack.c.l.b16 %v208
        %v304 = vpack.c.b16 %v301, %v300
        %v305 = vpack.c.b16 %v303, %v302
        %vm307 = vcmask 220160
        %v309 = vsel %vm307, %v280, 0
        %v312 = vsel %vm307, %v281, 0
        %v315 = vsel %vm307, %v282, 0
        %v318 = vsel %vm307, %v283, 0
        %v321 = vsel %vm307, %v284, 0
        %v324 = vsel %vm307, %v285, 0
        %v327 = vsel %vm307, %v286, 0
        %v330 = vsel %vm307, %v287, 0
        %v333 = vsel %vm307, %v288, 0
        %v336 = vsel %vm307, %v289, 0
        %v339 = vsel %vm307, %v290, 0
        %v342 = vsel %vm307, %v291, 0
        %v345 = vsel %vm307, %v292, 0
        %v348 = vsel %vm307, %v293, 0
        %v351 = vsel %vm307, %v294, 0
        %v354 = vsel %vm307, %v295, 0
        %vm356 = vcmask 1044480
        %vm357 = vcmask 1045504
        %v358 = vsel %vm356, 4294967295, 65535
        %v359 = vsel %vm357, %v358, 0
        %v361 = vand.u32 %v305, %v359
        %363 = vmatprep.subr.bf16.mxu0 0
        %364 = vmatpush1.bf16.msra.mxu0 0
        %365 = vmatprep.subr.bf16.mxu0 0
        %366 = vmatpush1.bf16.msra.mxu0 0
        %367 = vmatprep.subr.bf16.mxu0 0
        %368 = vmatpush1.bf16.msra.mxu0 0
        %369 = vmatprep.subr.bf16.mxu0 0
        %370 = vmatpush1.bf16.msra.mxu0 0
        %371 = vmatprep.subr.bf16.mxu0 0
        %372 = vmatpush1.bf16.msra.mxu0 0
        %373 = vmatprep.subr.bf16.mxu0 0
        %374 = vmatpush1.bf16.msra.mxu0 0
        %375 = vmatprep.subr.bf16.mxu0 0
        %376 = vmatpush1.bf16.msra.mxu0 %v361
        %377 = vmatprep.subr.bf16.mxu0 0
        %378 = vmatpush1.bf16.msra.mxu0 %v304
        %379 = vmatprep.subr.bf16.mxu0 0
        %380 = vmatpush2.bf16.msra.mxu0 0
        %381 = vmatprep.subr.bf16.mxu0 0
        %382 = vmatpush2.bf16.msra.mxu0 0
        %383 = vmatprep.subr.bf16.mxu0 0
        %384 = vmatpush2.bf16.msra.mxu0 0
        %385 = vmatprep.subr.bf16.mxu0 0
        %386 = vmatpush2.bf16.msra.mxu0 0
        %387 = vmatprep.subr.bf16.mxu0 0
        %388 = vmatpush2.bf16.msra.mxu0 0
        %389 = vmatprep.subr.bf16.mxu0 0
        %390 = vmatpush2.bf16.msra.mxu0 0
        %391 = vmatprep.subr.bf16.mxu0 0
        %392 = vmatpush2.bf16.msra.mxu0 0
        %393 = vmatprep.subr.bf16.mxu0 0
        %394 = vmatpush2.bf16.msra.mxu0 0
        %395 = vmatprep.mubr.bf16.mxu0 0
        %396 = vmatmul.mubr.bf16.gmra.mxu0 %v309
        %v397 = vpop.f32.mrf.mxu0
        %v398 = vadd.f32 %v214, %v397
        %v399 = vpop.f32.mrf.mxu0
        %v400 = vpop.f32.mrf.mxu0
        %v401 = vadd.f32 %v214, %v400
        %v402 = vpop.f32.mrf.mxu0
        %403 = vmatprep.mubr.bf16.mxu0 0
        %404 = vmatmul.mubr.bf16.gmra.mxu0 %v312
        %v405 = vpop.f32.mrf.mxu0
        %v406 = vadd.f32 %v214, %v405
        %v407 = vpop.f32.mrf.mxu0
        %v408 = vpop.f32.mrf.mxu0
        %v409 = vadd.f32 %v214, %v408
        %v410 = vpop.f32.mrf.mxu0
        %411 = vmatprep.mubr.bf16.mxu0 0
        %412 = vmatmul.mubr.bf16.gmra.mxu0 %v315
        %v413 = vpop.f32.mrf.mxu0
        %v414 = vadd.f32 %v214, %v413
        %v415 = vpop.f32.mrf.mxu0
        %v416 = vpop.f32.mrf.mxu0
        %v417 = vadd.f32 %v214, %v416
        %v418 = vpop.f32.mrf.mxu0
        %419 = vmatprep.mubr.bf16.mxu0 0
        %420 = vmatmul.mubr.bf16.gmra.mxu0 %v318
        %v421 = vpop.f32.mrf.mxu0
        %v422 = vadd.f32 %v214, %v421
        %v423 = vpop.f32.mrf.mxu0
        %v424 = vpop.f32.mrf.mxu0
        %v425 = vadd.f32 %v214, %v424
        %v426 = vpop.f32.mrf.mxu0
        %427 = vmatprep.mubr.bf16.mxu0 0
        %428 = vmatmul.mubr.bf16.gmra.mxu0 %v321
        %v429 = vpop.f32.mrf.mxu0
        %v430 = vadd.f32 %v214, %v429
        %v431 = vpop.f32.mrf.mxu0
        %v432 = vpop.f32.mrf.mxu0
        %v433 = vadd.f32 %v214, %v432
        %v434 = vpop.f32.mrf.mxu0
        %435 = vmatprep.mubr.bf16.mxu0 0
        %436 = vmatmul.mubr.bf16.gmra.mxu0 %v324
        %v437 = vpop.f32.mrf.mxu0
        %v438 = vadd.f32 %v214, %v437
        %v439 = vpop.f32.mrf.mxu0
        %v440 = vpop.f32.mrf.mxu0
        %v441 = vadd.f32 %v214, %v440
        %v442 = vpop.f32.mrf.mxu0
        %443 = vmatprep.mubr.bf16.mxu0 0
        %444 = vmatmul.mubr.bf16.gmra.mxu0 %v327
        %v445 = vpop.f32.mrf.mxu0
        %v446 = vadd.f32 %v214, %v445
        %v447 = vpop.f32.mrf.mxu0
        %v448 = vpop.f32.mrf.mxu0
        %v449 = vadd.f32 %v214, %v448
        %v450 = vpop.f32.mrf.mxu0
        %451 = vmatprep.mubr.bf16.mxu0 0
        %452 = vmatmul.mubr.bf16.gmra.mxu0 %v330
        %v453 = vpop.f32.mrf.mxu0
        %v454 = vadd.f32 %v214, %v453
        %v455 = vpop.f32.mrf.mxu0
        %v456 = vpop.f32.mrf.mxu0
        %v457 = vadd.f32 %v214, %v456
        %v458 = vpop.f32.mrf.mxu0
        %459 = vmatprep.mubr.bf16.mxu0 0
        %460 = vmatmul.mubr.bf16.gmra.mxu0 %v333
        %v461 = vpop.f32.mrf.mxu0
        %v462 = vadd.f32 %v214, %v461
        %v463 = vpop.f32.mrf.mxu0
        %v464 = vpop.f32.mrf.mxu0
        %v465 = vadd.f32 %v214, %v464
        %v466 = vpop.f32.mrf.mxu0
        %467 = vmatprep.mubr.bf16.mxu0 0
        %468 = vmatmul.mubr.bf16.gmra.mxu0 %v336
        %v469 = vpop.f32.mrf.mxu0
        %v470 = vadd.f32 %v214, %v469
        %v471 = vpop.f32.mrf.mxu0
        %v472 = vpop.f32.mrf.mxu0
        %v473 = vadd.f32 %v214, %v472
        %v474 = vpop.f32.mrf.mxu0
        %475 = vmatprep.mubr.bf16.mxu0 0
        %476 = vmatmul.mubr.bf16.gmra.mxu0 %v339
        %v477 = vpop.f32.mrf.mxu0
        %v478 = vadd.f32 %v214, %v477
        %v479 = vpop.f32.mrf.mxu0
        %v480 = vpop.f32.mrf.mxu0
        %v481 = vadd.f32 %v214, %v480
        %v482 = vpop.f32.mrf.mxu0
        %483 = vmatprep.mubr.bf16.mxu0 0
        %484 = vmatmul.mubr.bf16.gmra.mxu0 %v342
        %v485 = vpop.f32.mrf.mxu0
        %v486 = vadd.f32 %v214, %v485
        %v487 = vpop.f32.mrf.mxu0
        %v488 = vpop.f32.mrf.mxu0
        %v489 = vadd.f32 %v214, %v488
        %v490 = vpop.f32.mrf.mxu0
        %491 = vmatprep.mubr.bf16.mxu0 0
        %492 = vmatmul.mubr.bf16.gmra.mxu0 %v345
        %v493 = vpop.f32.mrf.mxu0
        %v494 = vadd.f32 %v214, %v493
        %v495 = vpop.f32.mrf.mxu0
        %v496 = vpop.f32.mrf.mxu0
        %v497 = vadd.f32 %v214, %v496
        %v498 = vpop.f32.mrf.mxu0
        %499 = vmatprep.mubr.bf16.mxu0 0
        %500 = vmatmul.mubr.bf16.gmra.mxu0 %v348
        %v501 = vpop.f32.mrf.mxu0
        %v502 = vadd.f32 %v214, %v501
        %v503 = vpop.f32.mrf.mxu0
        %v504 = vpop.f32.mrf.mxu0
        %v505 = vadd.f32 %v214, %v504
        %v506 = vpop.f32.mrf.mxu0
        %507 = vmatprep.mubr.bf16.mxu0 0
        %508 = vmatmul.mubr.bf16.gmra.mxu0 %v351
        %v509 = vpop.f32.mrf.mxu0
        %v510 = vadd.f32 %v214, %v509
        %v511 = vpop.f32.mrf.mxu0
        %v512 = vpop.f32.mrf.mxu0
        %v513 = vadd.f32 %v214, %v512
        %v514 = vpop.f32.mrf.mxu0
        %515 = vmatprep.mubr.bf16.mxu0 0
        %516 = vmatmul.mubr.bf16.gmra.mxu0 %v354
        %v517 = vpop.f32.mrf.mxu0
        %v518 = vadd.f32 %v214, %v517
        %v519 = vpop.f32.mrf.mxu0
        %v520 = vpop.f32.mrf.mxu0
        %v521 = vadd.f32 %v214, %v520
        %v522 = vpop.f32.mrf.mxu0
        %523 = vdwg.mxu0
        %vm524 = vcmp.gt.f32.partialorder %v398, 0.0
        %vm525 = vcmp.gt.f32.partialorder %v401, 0.0
        %vm526 = vcmp.gt.f32.partialorder %v406, 0.0
        %vm527 = vcmp.gt.f32.partialorder %v409, 0.0
        %vm528 = vcmp.gt.f32.partialorder %v414, 0.0
        %vm529 = vcmp.gt.f32.partialorder %v417, 0.0
        %vm530 = vcmp.gt.f32.partialorder %v422, 0.0
        %vm531 = vcmp.gt.f32.partialorder %v425, 0.0
        %vm532 = vcmp.gt.f32.partialorder %v430, 0.0
        %vm533 = vcmp.gt.f32.partialorder %v433, 0.0
        %vm534 = vcmp.gt.f32.partialorder %v438, 0.0
        %vm535 = vcmp.gt.f32.partialorder %v441, 0.0
        %vm536 = vcmp.gt.f32.partialorder %v446, 0.0
        %vm537 = vcmp.gt.f32.partialorder %v449, 0.0
        %vm538 = vcmp.gt.f32.partialorder %v454, 0.0
        %vm539 = vcmp.gt.f32.partialorder %v457, 0.0
        %vm540 = vcmp.gt.f32.partialorder %v462, 0.0
        %vm541 = vcmp.gt.f32.partialorder %v465, 0.0
        %vm542 = vcmp.gt.f32.partialorder %v470, 0.0
        %vm543 = vcmp.gt.f32.partialorder %v473, 0.0
        %vm544 = vcmp.gt.f32.partialorder %v478, 0.0
        %vm545 = vcmp.gt.f32.partialorder %v481, 0.0
        %vm546 = vcmp.gt.f32.partialorder %v486, 0.0
        %vm547 = vcmp.gt.f32.partialorder %v489, 0.0
        %vm548 = vcmp.gt.f32.partialorder %v494, 0.0
        %vm549 = vcmp.gt.f32.partialorder %v497, 0.0
        %vm550 = vcmp.gt.f32.partialorder %v502, 0.0
        %vm551 = vcmp.gt.f32.partialorder %v505, 0.0
        %vm552 = vcmp.gt.f32.partialorder %v510, 0.0
        %vm553 = vcmp.gt.f32.partialorder %v513, 0.0
        %vm554 = vcmp.gt.f32.partialorder %v518, 0.0
        %vm555 = vcmp.gt.f32.partialorder %v521, 0.0
        %v556 = vmul.f32 %v398, 0.1
        %v557 = vmul.f32 %v401, 0.1
        %v558 = vmul.f32 %v406, 0.1
        %v559 = vmul.f32 %v409, 0.1
        %v560 = vmul.f32 %v414, 0.1
        %v561 = vmul.f32 %v417, 0.1
        %v562 = vmul.f32 %v422, 0.1
        %v563 = vmul.f32 %v425, 0.1
        %v564 = vmul.f32 %v430, 0.1
        %v565 = vmul.f32 %v433, 0.1
        %v566 = vmul.f32 %v438, 0.1
        %v567 = vmul.f32 %v441, 0.1
        %v568 = vmul.f32 %v446, 0.1
        %v569 = vmul.f32 %v449, 0.1
        %v570 = vmul.f32 %v454, 0.1
        %v571 = vmul.f32 %v457, 0.1
        %v572 = vmul.f32 %v462, 0.1
        %v573 = vmul.f32 %v465, 0.1
        %v574 = vmul.f32 %v470, 0.1
        %v575 = vmul.f32 %v473, 0.1
        %v576 = vmul.f32 %v478, 0.1
        %v577 = vmul.f32 %v481, 0.1
        %v578 = vmul.f32 %v486, 0.1
        %v579 = vmul.f32 %v489, 0.1
        %v580 = vmul.f32 %v494, 0.1
        %v581 = vmul.f32 %v497, 0.1
        %v582 = vmul.f32 %v502, 0.1
        %v583 = vmul.f32 %v505, 0.1
        %v584 = vmul.f32 %v510, 0.1
        %v585 = vmul.f32 %v513, 0.1
        %v586 = vmul.f32 %v518, 0.1
        %v587 = vmul.f32 %v521, 0.1
        %v588 = vsel %vm524, %v398, %v556
        %v589 = vsel %vm525, %v401, %v557
        %v590 = vsel %vm526, %v406, %v558
        %v591 = vsel %vm527, %v409, %v559
        %v592 = vsel %vm528, %v414, %v560
        %v593 = vsel %vm529, %v417, %v561
        %v594 = vsel %vm530, %v422, %v562
        %v595 = vsel %vm531, %v425, %v563
        %v596 = vsel %vm532, %v430, %v564
        %v597 = vsel %vm533, %v433, %v565
        %v598 = vsel %vm534, %v438, %v566
        %v599 = vsel %vm535, %v441, %v567
        %v600 = vsel %vm536, %v446, %v568
        %v601 = vsel %vm537, %v449, %v569
        %v602 = vsel %vm538, %v454, %v570
        %v603 = vsel %vm539, %v457, %v571
        %v604 = vsel %vm540, %v462, %v572
        %v605 = vsel %vm541, %v465, %v573
        %v606 = vsel %vm542, %v470, %v574
        %v607 = vsel %vm543, %v473, %v575
        %v608 = vsel %vm544, %v478, %v576
        %v609 = vsel %vm545, %v481, %v577
        %v610 = vsel %vm546, %v486, %v578
        %v611 = vsel %vm547, %v489, %v579
        %v612 = vsel %vm548, %v494, %v580
        %v613 = vsel %vm549, %v497, %v581
        %v614 = vsel %vm550, %v502, %v582
        %v615 = vsel %vm551, %v505, %v583
        %v616 = vsel %vm552, %v510, %v584
        %v617 = vsel %vm553, %v513, %v585
        %v618 = vsel %vm554, %v518, %v586
        %v619 = vsel %vm555, %v521, %v587
        %620 = vst [vmem:[%s164] sm:$0xff] %v588
        %621 = vst [vmem:[%s164 + $0x8] sm:$0xff] %v589
        %622 = vst [vmem:[%s164 + $0x10] sm:$0xff] %v590
        %623 = vst [vmem:[%s164 + $0x18] sm:$0xff] %v591
        %624 = vst [vmem:[%s164 + $0x20] sm:$0xff] %v592
        %625 = vst [vmem:[%s164 + $0x28] sm:$0xff] %v593
        %626 = vst [vmem:[%s164 + $0x30] sm:$0xff] %v594
        %627 = vst [vmem:[%s164 + $0x38] sm:$0xff] %v595
        %628 = vst [vmem:[%s164 + $0x40] sm:$0xff] %v596
        %629 = vst [vmem:[%s164 + $0x48] sm:$0xff] %v597
        %630 = vst [vmem:[%s164 + $0x50] sm:$0xff] %v598
        %631 = vst [vmem:[%s164 + $0x58] sm:$0xff] %v599
        %632 = vst [vmem:[%s164 + $0x60] sm:$0xff] %v600
        %633 = vst [vmem:[%s164 + $0x68] sm:$0xff] %v601
        %634 = vst [vmem:[%s164 + $0x70] sm:$0xff] %v602
        %635 = vst [vmem:[%s164 + $0x78] sm:$0xff] %v603
        %636 = vst [vmem:[%s164 + $0x80] sm:$0xff] %v604
        %637 = vst [vmem:[%s164 + $0x88] sm:$0xff] %v605
        %638 = vst [vmem:[%s164 + $0x90] sm:$0xff] %v606
        %639 = vst [vmem:[%s164 + $0x98] sm:$0xff] %v607
        %640 = vst [vmem:[%s164 + $0xa0] sm:$0xff] %v608
        %641 = vst [vmem:[%s164 + $0xa8] sm:$0xff] %v609
        %642 = vst [vmem:[%s164 + $0xb0] sm:$0xff] %v610
        %643 = vst [vmem:[%s164 + $0xb8] sm:$0xff] %v611
        %644 = vst [vmem:[%s164 + $0xc0] sm:$0xff] %v612
        %645 = vst [vmem:[%s164 + $0xc8] sm:$0xff] %v613
        %646 = vst [vmem:[%s164 + $0xd0] sm:$0xff] %v614
        %647 = vst [vmem:[%s164 + $0xd8] sm:$0xff] %v615
        %648 = vst [vmem:[%s164 + $0xe0] sm:$0xff] %v616
        %649 = vst [vmem:[%s164 + $0xe8] sm:$0xff] %v617
        %650 = vst [vmem:[%s164 + $0xf0] sm:$0xff] %v618
        %651 = vst [vmem:[%s164 + $0xf8] sm:$0xff] %v619
        %s652 = sand.u32 %s93, 1
        %s653 = scalar_lea.sflag [#allocation3], %s652
        %s654 = sand.u32 %s93, 1
        %s655 = smul.addr %s654, 256
        %s656 = scalar_lea.vmem [#allocation2], %s655
        // Predicated region
        $region33: #{tpu_custom_call.1} parent=31 // pred_check
          %p657 = pneg %p103
        $region34: #{tpu_custom_call.1} parent=31 // pred_check_branch
          %659 = sbr.rel (%p657) target = $region36
        $region35: #{tpu_custom_call.1} parent=31 // pred_region
          %s660 = smul.u32 32, %s17
          %s662 = ssub.s32 4096, 4096
          %663 = vsyncadd %s653, %s662
          %s664 = smul.addr %s660, 128
          %s665 = scalar_lea.hbm %s3, %s664
          %s666 = sshll.u32 %s656, 4
          %s667 = int_to_ptr.vmem [resolvable:$true] %s666
          %672 = dma.vmem_to_hbm [thread:$0]  %s667, 4096, %s665, %s653, 128, 128, 8
        $region36: #{tpu_custom_call.1} parent=31 // pred_fallthru
          _
      $region32: #{tpu_custom_call.1} parent=5 // pred_fallthru
        _
      %p673 = scmp.le.s32.totalorder 2, %s12
      // Predicated region
      $region37: #{tpu_custom_call.1} parent=5 // pred_check
        %p674 = pneg %p673
      $region38: #{tpu_custom_call.1} parent=5 // pred_check_branch
        %676 = sbr.rel (%p674) target = $region40
      $region39: #{tpu_custom_call.1} parent=5 // pred_region
        %s677 = ssub.s32 %s12, 2
        // Predicated region
        $region41: #{tpu_custom_call.1} parent=39 // pred_check
          %p678 = pneg %p109
        $region42: #{tpu_custom_call.1} parent=39 // pred_check_branch
          %680 = sbr.rel (%p678) target = $region44
        $region43: #{tpu_custom_call.1} parent=39 // pred_region
          %s681 = sand.u32 %s94, 1
          %s682 = scalar_lea.sflag [#allocation3], %s681
          %s683 = sand.u32 %s94, 1
          %s684 = smul.addr %s683, 256
          %s685 = scalar_lea.vmem [#allocation2], %s684
          %686 = dma.done %s682, 4096
        $region44: #{tpu_custom_call.1} parent=39 // pred_fallthru
          _
      $region40: #{tpu_custom_call.1} parent=5 // pred_fallthru
        _
    $region6: #{tpu_custom_call.1} parent=1 // loop_footer
      %s16 = sadd.s32 1, %s12
    $region7: #{tpu_custom_call.1} parent=1 // loop_footer_branch
      %11 = sbr.rel target = $region3
    $region8: #{tpu_custom_call.1} parent=1 // loop_exit
      _
    %687 = vsyncpa [#allocation3], 1
    %s688 = scalar_lea.sflag [#allocation3], 1
    %689 = vsyncpa %s688, 1

</llo_original>
